<compile_context>
chip_gen: v5e
topology: v5e:2x2
jax: 0.10.0
libtpu: 0.0.40
codegen_flags: <defaults>
</compile_context>

<pallas_src>
import numpy as np
import jax
import jax.numpy as jnp
from jax.experimental import pallas as pl
from jax.experimental.pallas import tpu as pltpu

LANES = 128


# ------------------------------ kernels ------------------------------------


def _make_sum_kernel(n):
    def kernel(*refs):                       # n input tiles, then the output tile
        x_refs, o_ref = refs[:n], refs[n]
        acc = x_refs[0][...].astype(jnp.float32)
        for r in x_refs[1:]:                 # static unrolled; one live accumulator
            acc = acc + r[...].astype(jnp.float32)
        o_ref[...] = acc.astype(o_ref.dtype)
    return kernel


def _make_weighted_sum_kernel(n):
    def kernel(w_ref, *refs):
        # w_ref: SMEM (n-1,) f32 effective weights (= 2*sigmoid(w)); scalar reads.
        x_refs, o_ref = refs[:n], refs[n]
        acc = x_refs[0][...].astype(jnp.float32)
        for i in range(n - 1):               # static unrolled
            acc = acc + x_refs[i + 1][...].astype(jnp.float32) * w_ref[i]
        o_ref[...] = acc.astype(o_ref.dtype)
    return kernel


# ------------------------------ tiling --------------------------------------


def _sublanes(dtype):
    # packed-sublane granularity: 8 for 4-byte, 16 for 2-byte, 32 for 1-byte dtypes
    return max(8, 32 // jnp.dtype(dtype).itemsize)


def _tpu_vmem_capacity_bytes():
    try:
        return int(getattr(pltpu.get_tpu_info(), "vmem_capacity_bytes", 64 << 20))
    except Exception:
        return 64 << 20          # conservative (v7x-sized) fallback


def _vmem_budget_bytes(cap):
    # ~40% of physical VMEM for our live block buffers
    # (v5e/v6e: ~51 MiB, v7x: ~25 MiB), leaving headroom for compiler scratch.
    return max(8 << 20, int(cap * 0.4))


def _choose_tiling(rows, n, dtype, budget):
    """Pick (tile_rows, grid_steps) for an n-way sum over a (rows, 128) slab."""
    sub = _sublanes(dtype)
    itemsize = jnp.dtype(dtype).itemsize
    # 2 pipeline buffers x (n inputs + 1 output) blocks of (tile_r, 128) live at once.
    max_tile = budget // (2 * (n + 1) * LANES * itemsize)
    max_tile = max(sub, (max_tile // sub) * sub)
    if rows <= sub:
        return rows, 1                        # single block == full array dims
    # Prefer >= 2 grid steps so the "parallel" axis has work for both v7x TCs.
    half = -(-rows // 2)                      # cdiv(rows, 2)
    half = -(-half // sub) * sub              # round up to sublane granularity
    tile_r = max(sub, min(max_tile, half))
    return tile_r, pl.cdiv(rows, tile_r)


# ------------------------------ wrapper -------------------------------------


def sum_module(xs, weight=False, w=None):
    """Pallas equivalent of Sum(n, weight).forward(xs) for a list/tuple xs of n arrays."""
    n = len(xs)
    orig_shape = xs[0].shape
    dtype = xs[0].dtype
    itemsize = jnp.dtype(dtype).itemsize
    total = int(np.prod(orig_shape))

    # Lane-dense (rows, 128) view.  Zero-copy bitcast when lane-aligned;
    # otherwise pad only up to the next multiple of 128 (rare path).
    rem = total % LANES
    total_p = total if rem == 0 else total + (LANES - rem)
    rows = total_p // LANES

    def to_rows(x):
        flat = x.reshape(-1)
        if total_p != total:
            flat = jnp.pad(flat, (0, total_p - total))
        return flat.reshape(rows, LANES)

    xs2d = [to_rows(x) for x in xs]

    cap = _tpu_vmem_capacity_bytes()
    budget = _vmem_budget_bytes(cap)
    tile_r, grid_n = _choose_tiling(rows, n, dtype, budget)

    tile_spec = pl.BlockSpec((tile_r, LANES), lambda i, *_: (i, 0))
    out_shape = jax.ShapeDtypeStruct((rows, LANES), dtype)
    cparams = pltpu.CompilerParams(
        dimension_semantics=("parallel",),
        vmem_limit_bytes=int(min(int(cap * 0.75), budget + (16 << 20))),
    )
    cost = pl.CostEstimate(
        flops=(n - 1) * total_p * (2 if weight else 1),
        transcendentals=0,
        bytes_accessed=(n + 1) * total_p * itemsize,
    )

    if weight:
        assert w is not None and w.shape == (n - 1,)
        # tiny (n-1,) op, hoisted so sigmoid isn't redone per tile
        w_eff = (2.0 * jax.nn.sigmoid(w.astype(jnp.float32))).astype(jnp.float32)
        out2d = pl.pallas_call(
            _make_weighted_sum_kernel(n),
            out_shape=out_shape,
            grid_spec=pltpu.PrefetchScalarGridSpec(
                num_scalar_prefetch=1,
                grid=(grid_n,),
                in_specs=[tile_spec] * n,
                out_specs=tile_spec,
            ),
            compiler_params=cparams,
            cost_estimate=cost,
        )(w_eff, *xs2d)
    else:
        out2d = pl.pallas_call(
            _make_sum_kernel(n),
            out_shape=out_shape,
            grid=(grid_n,),
            in_specs=[tile_spec] * n,
            out_specs=tile_spec,
            compiler_params=cparams,
            cost_estimate=cost,
        )(*xs2d)

    if total_p != total:
        return out2d.reshape(-1)[:total].reshape(orig_shape)
    return out2d.reshape(orig_shape)


# ------------------------------ reference -----------------------------------


def sum_module_ref(xs, weight=False, w=None):
    y = xs[0]
    if weight:
        w_eff = jax.nn.sigmoid(w) * 2.0
        for i in range(len(xs) - 1):
            y = y + xs[i + 1] * w_eff[i]
    else:
        for i in range(len(xs) - 1):
            y = y + xs[i + 1]
    return y


# ------------------------------ main ----------------------------------------


if __name__ == "__main__":
    key = jax.random.PRNGKey(0)

    # ---- main test: n=3, NCHW (2,4,16,16) f32, both paths (grid of 2 blocks) ----
    n = 3
    B, C, H, W = 2, 4, 16, 16
    keys = jax.random.split(key, n)
    xs = [jax.random.normal(keys[i], (B, C, H, W), dtype=jnp.float32)
          for i in range(n)]
    # parameter init exactly as the module: self.w = -torch.arange(1., n) / 2
    w_param = -jnp.arange(1.0, float(n), dtype=jnp.float32) / 2.0    # (n-1,)

    y0 = jax.block_until_ready(sum_module(xs, weight=False))
    np.testing.assert_allclose(np.asarray(y0),
                               np.asarray(sum_module_ref(xs, weight=False)),
                               rtol=1e-6, atol=1e-6)

    y1 = jax.block_until_ready(sum_module(xs, weight=True, w=w_param))
    np.testing.assert_allclose(np.asarray(y1),
                               np.asarray(sum_module_ref(xs, weight=True, w=w_param)),
                               rtol=1e-5, atol=1e-5)

    # ---- padding path: element count not a multiple of 128 ----
    n2 = 2
    keys2 = jax.random.split(jax.random.PRNGKey(1), n2)
    xs2 = [jax.random.normal(keys2[i], (2, 3, 5, 7), dtype=jnp.float32)
           for i in range(n2)]
    y2 = jax.block_until_ready(sum_module(xs2, weight=False))
    np.testing.assert_allclose(np.asarray(y2),
                               np.asarray(sum_module_ref(xs2, weight=False)),
                               rtol=1e-6, atol=1e-6)

    # ---- uneven last block: rows=30, tile=16 -> last block masked ----
    n3 = 3
    keys3 = jax.random.split(jax.random.PRNGKey(2), n3)
    xs3 = [jax.random.normal(keys3[i], (2, 3, 5, 128), dtype=jnp.float32)
           for i in range(n3)]
    w3 = -jnp.arange(1.0, float(n3), dtype=jnp.float32) / 2.0
    y3 = jax.block_until_ready(sum_module(xs3, weight=True, w=w3))
    np.testing.assert_allclose(np.asarray(y3),
                               np.asarray(sum_module_ref(xs3, weight=True, w=w3)),
                               rtol=1e-5, atol=1e-5)

    # ---- multi-tile grid path: rows=2048 ----
    n4 = 3
    keys4 = jax.random.split(jax.random.PRNGKey(3), n4)
    xs4 = [jax.random.normal(keys4[i], (4, 8, 64, 128), dtype=jnp.float32)
           for i in range(n4)]
    w4 = -jnp.arange(1.0, float(n4), dtype=jnp.float32) / 2.0
    y4 = jax.block_until_ready(sum_module(xs4, weight=True, w=w4))
    np.testing.assert_allclose(np.asarray(y4),
                               np.asarray(sum_module_ref(xs4, weight=True, w=w4)),
                               rtol=1e-5, atol=1e-5)

    # ---- bf16 path: packed sublanes + f32 accumulation ----
    n5 = 4
    keys5 = jax.random.split(jax.random.PRNGKey(4), n5)
    xs5 = [jax.random.normal(keys5[i], (2, 4, 16, 16), dtype=jnp.bfloat16)
           for i in range(n5)]
    y5 = jax.block_until_ready(sum_module(xs5, weight=False))
    np.testing.assert_allclose(np.asarray(y5, dtype=np.float32),
                               np.asarray(sum_module_ref(xs5, weight=False),
                                          dtype=np.float32),
                               rtol=5e-2, atol=1e-1)

    print("KERNEL_OK")
</pallas_src>

<mosaic_0001>
module attributes {stable_mosaic.version = 11 : i64} {
  func.func @kernel(%arg0: i32, %arg1: memref<8x128xf32, #tpu.memory_space<vmem>>, %arg2: memref<8x128xf32, #tpu.memory_space<vmem>>, %arg3: memref<8x128xf32, #tpu.memory_space<vmem>>, %arg4: memref<8x128xf32, #tpu.memory_space<vmem>>) attributes {dimension_semantics = [#tpu.dimension_semantics<parallel>], iteration_bounds = array<i64: 2>, scalar_prefetch = 0 : i64, scratch_operands = 0 : i64, tpu.core_type = #tpu.core_type<tc>, window_params = [{transform_indices = @transform_0, window_bounds = array<i64: 8, 128>}, {transform_indices = @transform_1, window_bounds = array<i64: 8, 128>}, {transform_indices = @transform_2, window_bounds = array<i64: 8, 128>}, {transform_indices = @transform_3, window_bounds = array<i64: 8, 128>}]} {
    %c0 = arith.constant 0 : index
    %c0_0 = arith.constant 0 : index
    %0 = vector.load %arg1[%c0, %c0_0] : memref<8x128xf32, #tpu.memory_space<vmem>>, vector<8x128xf32>
    %c0_1 = arith.constant 0 : index
    %c0_2 = arith.constant 0 : index
    %1 = vector.load %arg2[%c0_1, %c0_2] : memref<8x128xf32, #tpu.memory_space<vmem>>, vector<8x128xf32>
    %2 = arith.addf %0, %1 : vector<8x128xf32>
    %c0_3 = arith.constant 0 : index
    %c0_4 = arith.constant 0 : index
    %3 = vector.load %arg3[%c0_3, %c0_4] : memref<8x128xf32, #tpu.memory_space<vmem>>, vector<8x128xf32>
    %4 = arith.addf %2, %3 : vector<8x128xf32>
    %c0_5 = arith.constant 0 : index
    %c0_6 = arith.constant 0 : index
    %5 = vector.load %arg4[%c0_5, %c0_6] : memref<8x128xf32, #tpu.memory_space<vmem>>, vector<8x128xf32>
    tpu.vector_store %arg4[%c0_5, %c0_6], %4 {strides = array<i32>} : memref<8x128xf32, #tpu.memory_space<vmem>>, vector<8x128xf32>,
    return
  }
  func.func @transform_0(%arg0: i32) -> (i32, i32) {
    %c0_i32 = arith.constant 0 : i32
    %c0_i32_0 = arith.constant 0 : i32
    return %arg0, %c0_i32 : i32, i32
  }
  func.func @transform_1(%arg0: i32) -> (i32, i32) {
    %c0_i32 = arith.constant 0 : i32
    %c0_i32_0 = arith.constant 0 : i32
    return %arg0, %c0_i32 : i32, i32
  }
  func.func @transform_2(%arg0: i32) -> (i32, i32) {
    %c0_i32 = arith.constant 0 : i32
    %c0_i32_0 = arith.constant 0 : i32
    return %arg0, %c0_i32 : i32, i32
  }
  func.func @transform_3(%arg0: i32) -> (i32, i32) {
    %c0_i32 = arith.constant 0 : i32
    %c0_i32_0 = arith.constant 0 : i32
    return %arg0, %c0_i32 : i32, i32
  }
}

</mosaic_0001>

<llo_original>
// kernel: tpu_custom_call.1
$region0: #{tpu_custom_call.1}
  #allocation0 [shape = 'u32[]', space=smem, size = 0x4, offset = 0x4, fixed_abs, tag = 'smem constant byte address 0x4 - core index']
  #allocation1 [shape = 'u32[72,128]{1,0:T(1,128)}', space=vmem, size = 0x9000, scoped, tag = 'internal scratch']
  %s0 = inlined_call_operand.hbm [shape: f32[16,128], index: 0, kind: input, shape index: {}]
  %s1 = inlined_call_operand.hbm [shape: f32[16,128], index: 1, kind: input, shape index: {}]
  %s2 = inlined_call_operand.hbm [shape: f32[16,128], index: 2, kind: input, shape index: {}]
  %s3 = inlined_call_operand.hbm [shape: f32[16,128], index: 3, kind: output, shape index: {}]
  %s4 = sld [smem:[#allocation0]]
  $region57: #{tpu_custom_call.1} parent=0
    _
  %s6 = ssub.s32 1, %s4
  %s7 = scalar_select 0, %s6, %s4
  $region1: #{tpu_custom_call.1} parent=0
    #allocation2 [shape = 'u8[8192]{0}', space=vmem, size = 0x2000, scoped, tag = 'input window, operand 0']
    #allocation3 [shape = 's32[2]{0}', space=sflag, size = 0x8, scoped, tag = 'scoped memory for tpu_custom_call.1']
    #allocation4 [shape = 's32[2]{0}', space=sflag, size = 0x8, scoped, tag = 'scoped memory for tpu_custom_call.1']
    #allocation5 [shape = 'u8[8192]{0}', space=vmem, size = 0x2000, scoped, tag = 'input window, operand 1']
    #allocation6 [shape = 's32[2]{0}', space=sflag, size = 0x8, scoped, tag = 'scoped memory for tpu_custom_call.1']
    #allocation7 [shape = 'u8[8192]{0}', space=vmem, size = 0x2000, scoped, tag = 'input window, operand 2']
    #allocation8 [shape = 'u8[8192]{0}', space=vmem, size = 0x2000, scoped, tag = 'output window, operand 0']
    %8 = vsyncpa [#allocation3], 0
    %s9 = scalar_lea.sflag [#allocation3], 1
    %10 = vsyncpa %s9, 0
    %11 = vsyncpa [#allocation6], 0
    %s12 = scalar_lea.sflag [#allocation6], 1
    %13 = vsyncpa %s12, 0
    %14 = vsyncpa [#allocation4], 0
    %s15 = scalar_lea.sflag [#allocation4], 1
    %16 = vsyncpa %s15, 0
    loop: start=0, step=1, limit=4
    $region2: #{tpu_custom_call.1} parent=1 // loop_pre_header
      _
    $region3: #{tpu_custom_call.1} parent=1 // loop_header
      %s18 = sphi 0, %s22
      %p19 = scmp.ge.s32.totalorder %s18, 4
      %s28 = sphi 0, %s30
      %s31 = sphi 0, %s28
      %s32 = sphi 0, %s31
      %s48 = sphi 0, %s32
      %s54 = sphi 0, %s56
      %s57 = sphi 0, %s54
      %s58 = sphi 0, %s57
      %s74 = sphi 0, %s58
      %s80 = sphi 0, %s82
      %s83 = sphi 0, %s80
      %s84 = sphi 0, %s83
      %s100 = sphi 0, %s84
      %s106 = sphi 0, %s108
      %s109 = sphi 0, %s106
      %s110 = sphi 0, %s109
      %s126 = sphi 0, %s110
    $region4: #{tpu_custom_call.1} parent=1 // loop_header_branch
      %21 = sbr.rel (%p19) target = $region8
    $region5: #{tpu_custom_call.1} parent=1 // loop_body
      %s23 = ssub.s32 %s18, 1
      %s24 = ssub.s32 %s18, 2
      %s25 = sadd.s32 %s18, 1
      %s26 = ssub.s32 %s18, %s25
      %p27 = scmp.eq.s32.totalorder %s26, 0
      %s29 = sadd.s32 %s28, 1
      %s30 = scalar_select %p27, %s28, %s29
      %p33 = pneg %p27
      %p34 = scmp.eq.s32.totalorder %s18, 1
      %p35 = por %p33, %p34
      %p36 = scmp.ne.s32.totalorder %s28, %s31
      %p37 = scmp.eq.s32.totalorder %s18, 0
      %p38 = por %p36, %p37
      %p39 = scmp.ne.s32.totalorder %s28, %s31
      %p40 = scmp.eq.s32.totalorder %s23, 1
      %p41 = por %p39, %p40
      %p42 = scmp.ne.s32.totalorder %s31, %s32
      %p43 = scmp.eq.s32.totalorder %s23, 0
      %p44 = por %p42, %p43
      %p45 = scmp.ne.s32.totalorder %s31, %s32
      %p46 = scmp.eq.s32.totalorder %s24, 1
      %p47 = por %p45, %p46
      %p49 = scmp.ne.s32.totalorder %s32, %s48
      %p50 = scmp.eq.s32.totalorder %s24, 0
      %p51 = por %p49, %p50
      %s52 = ssub.s32 %s18, %s25
      %p53 = scmp.eq.s32.totalorder %s52, 0
      %s55 = sadd.s32 %s54, 1
      %s56 = scalar_select %p53, %s54, %s55
      %p59 = pneg %p53
      %p60 = scmp.eq.s32.totalorder %s18, 1
      %p61 = por %p59, %p60
      %p62 = scmp.ne.s32.totalorder %s54, %s57
      %p63 = scmp.eq.s32.totalorder %s18, 0
      %p64 = por %p62, %p63
      %p65 = scmp.ne.s32.totalorder %s54, %s57
      %p66 = scmp.eq.s32.totalorder %s23, 1
      %p67 = por %p65, %p66
      %p68 = scmp.ne.s32.totalorder %s57, %s58
      %p69 = scmp.eq.s32.totalorder %s23, 0
      %p70 = por %p68, %p69
      %p71 = scmp.ne.s32.totalorder %s57, %s58
      %p72 = scmp.eq.s32.totalorder %s24, 1
      %p73 = por %p71, %p72
      %p75 = scmp.ne.s32.totalorder %s58, %s74
      %p76 = scmp.eq.s32.totalorder %s24, 0
      %p77 = por %p75, %p76
      %s78 = ssub.s32 %s18, %s25
      %p79 = scmp.eq.s32.totalorder %s78, 0
      %s81 = sadd.s32 %s80, 1
      %s82 = scalar_select %p79, %s80, %s81
      %p85 = pneg %p79
      %p86 = scmp.eq.s32.totalorder %s18, 1
      %p87 = por %p85, %p86
      %p88 = scmp.ne.s32.totalorder %s80, %s83
      %p89 = scmp.eq.s32.totalorder %s18, 0
      %p90 = por %p88, %p89
      %p91 = scmp.ne.s32.totalorder %s80, %s83
      %p92 = scmp.eq.s32.totalorder %s23, 1
      %p93 = por %p91, %p92
      %p94 = scmp.ne.s32.totalorder %s83, %s84
      %p95 = scmp.eq.s32.totalorder %s23, 0
      %p96 = por %p94, %p95
      %p97 = scmp.ne.s32.totalorder %s83, %s84
      %p98 = scmp.eq.s32.totalorder %s24, 1
      %p99 = por %p97, %p98
      %p101 = scmp.ne.s32.totalorder %s84, %s100
      %p102 = scmp.eq.s32.totalorder %s24, 0
      %p103 = por %p101, %p102
      %s104 = ssub.s32 %s18, %s25
      %p105 = scmp.eq.s32.totalorder %s104, 0
      %s107 = sadd.s32 %s106, 1
      %s108 = scalar_select %p105, %s106, %s107
      %p111 = pneg %p105
      %p112 = scmp.eq.s32.totalorder %s18, 1
      %p113 = por %p111, %p112
      %p114 = scmp.ne.s32.totalorder %s106, %s109
      %p115 = scmp.eq.s32.totalorder %s18, 0
      %p116 = por %p114, %p115
      %p117 = scmp.ne.s32.totalorder %s106, %s109
      %p118 = scmp.eq.s32.totalorder %s23, 1
      %p119 = por %p117, %p118
      %p120 = scmp.ne.s32.totalorder %s109, %s110
      %p121 = scmp.eq.s32.totalorder %s23, 0
      %p122 = por %p120, %p121
      %p123 = scmp.ne.s32.totalorder %s109, %s110
      %p124 = scmp.eq.s32.totalorder %s24, 1
      %p125 = por %p123, %p124
      %p127 = scmp.ne.s32.totalorder %s110, %s126
      %p128 = scmp.eq.s32.totalorder %s24, 0
      %p129 = por %p127, %p128
      %p130 = scmp.le.s32.totalorder 1, %s18
      %p131 = scmp.lt.s32.totalorder %s18, 3
      %p132 = pnand %p130, %p131
      %p133 = pneg %p132
      // Predicated region
      $region9: #{tpu_custom_call.1} parent=5 // pred_check
        _
      $region10: #{tpu_custom_call.1} parent=5 // pred_check_branch
        %135 = sbr.rel (%p132) target = $region12
      $region11: #{tpu_custom_call.1} parent=5 // pred_region
        %s136 = ssub.s32 %s18, 1
      $region12: #{tpu_custom_call.1} parent=5 // pred_fallthru
        _
      %p137 = scmp.lt.s32.totalorder %s18, 2
      // Predicated region
      $region13: #{tpu_custom_call.1} parent=5 // pred_check
        %p138 = pneg %p137
      $region14: #{tpu_custom_call.1} parent=5 // pred_check_branch
        %140 = sbr.rel (%p138) target = $region16
      $region15: #{tpu_custom_call.1} parent=5 // pred_region
        // Predicated region
        $region17: #{tpu_custom_call.1} parent=15 // pred_check
          %p141 = pneg %p38
        $region18: #{tpu_custom_call.1} parent=15 // pred_check_branch
          %143 = sbr.rel (%p141) target = $region20
        $region19: #{tpu_custom_call.1} parent=15 // pred_region
          %s144 = sand.u32 %s28, 1
          %s145 = scalar_lea.sflag [#allocation3], %s144
          %s146 = sand.u32 %s28, 1
          %s147 = smul.addr %s146, 8
          %s148 = scalar_lea.vmem [#allocation2], %s147
          %150 = vsyncadd %s145, 0
          %s151 = smul.addr %s18, 8
          %s152 = scalar_lea.hbm %s0, %s151
          %s154 = sshll.u32 %s152, 4
          %s155 = int_to_ptr.hbm [resolvable:$true] %s154
          %s156 = sshll.u32 %s148, 4
          %s157 = int_to_ptr.vmem [resolvable:$true] %s156
          %159 = dma.hbm_to_vmem [thread:$0]  %s155, 128, %s157, %s145
        $region20: #{tpu_custom_call.1} parent=15 // pred_fallthru
          _
        // Predicated region
        $region21: #{tpu_custom_call.1} parent=15 // pred_check
          %p160 = pneg %p64
        $region22: #{tpu_custom_call.1} parent=15 // pred_check_branch
          %162 = sbr.rel (%p160) target = $region24
        $region23: #{tpu_custom_call.1} parent=15 // pred_region
          %s163 = sand.u32 %s18, 1
          %s164 = scalar_lea.sflag [#allocation6], %s163
          %s165 = sand.u32 %s54, 1
          %s166 = smul.addr %s165, 8
          %s167 = scalar_lea.vmem [#allocation5], %s166
          %169 = vsyncadd %s164, 0
          %s170 = smul.addr %s18, 8
          %s171 = scalar_lea.hbm %s1, %s170
          %s173 = sshll.u32 %s171, 4
          %s174 = int_to_ptr.hbm [resolvable:$true] %s173
          %s175 = sshll.u32 %s167, 4
          %s176 = int_to_ptr.vmem [resolvable:$true] %s175
          %178 = dma.hbm_to_vmem [thread:$0]  %s174, 128, %s176, %s164
        $region24: #{tpu_custom_call.1} parent=15 // pred_fallthru
          _
        // Predicated region
        $region25: #{tpu_custom_call.1} parent=15 // pred_check
          %p179 = pneg %p90
        $region26: #{tpu_custom_call.1} parent=15 // pred_check_branch
          %181 = sbr.rel (%p179) target = $region28
        $region27: #{tpu_custom_call.1} parent=15 // pred_region
          %s182 = sand.u32 %s18, 1
          %s183 = scalar_lea.sflag [#allocation6], %s182
          %s184 = sand.u32 %s80, 1
          %s185 = smul.addr %s184, 8
          %s186 = scalar_lea.vmem [#allocation7], %s185
          %188 = vsyncadd %s183, 0
          %s189 = smul.addr %s18, 8
          %s190 = scalar_lea.hbm %s2, %s189
          %s192 = sshll.u32 %s190, 4
          %s193 = int_to_ptr.hbm [resolvable:$true] %s192
          %s194 = sshll.u32 %s186, 4
          %s195 = int_to_ptr.vmem [resolvable:$true] %s194
          %197 = dma.hbm_to_vmem [thread:$0]  %s193, 128, %s195, %s183
        $region28: #{tpu_custom_call.1} parent=15 // pred_fallthru
          _
      $region16: #{tpu_custom_call.1} parent=5 // pred_fallthru
        _
      %p198 = scmp.le.s32.totalorder 1, %s18
      %p199 = scmp.lt.s32.totalorder %s18, 3
      %p200 = pnand %p198, %p199
      %p201 = pneg %p200
      // Predicated region
      $region29: #{tpu_custom_call.1} parent=5 // pred_check
        _
      $region30: #{tpu_custom_call.1} parent=5 // pred_check_branch
        %203 = sbr.rel (%p200) target = $region32
      $region31: #{tpu_custom_call.1} parent=5 // pred_region
        %s204 = ssub.s32 %s18, 1
        %s205 = sand.u32 %s31, 1
        %s206 = scalar_lea.sflag [#allocation3], %s205
        %s207 = sand.u32 %s31, 1
        %s208 = smul.addr %s207, 8
        %s209 = scalar_lea.vmem [#allocation2], %s208
        // Predicated region
        $region33: #{tpu_custom_call.1} parent=31 // pred_check
          %p210 = pneg %p44
        $region34: #{tpu_custom_call.1} parent=31 // pred_check_branch
          %212 = sbr.rel (%p210) target = $region36
        $region35: #{tpu_custom_call.1} parent=31 // pred_region
          %214 = dma.done %s206, 128
        $region36: #{tpu_custom_call.1} parent=31 // pred_fallthru
          _
        %s215 = sand.u32 %s23, 1
        %s216 = scalar_lea.sflag [#allocation6], %s215
        %s217 = sand.u32 %s57, 1
        %s218 = smul.addr %s217, 8
        %s219 = scalar_lea.vmem [#allocation5], %s218
        // Predicated region
        $region37: #{tpu_custom_call.1} parent=31 // pred_check
          %p220 = pneg %p70
        $region38: #{tpu_custom_call.1} parent=31 // pred_check_branch
          %222 = sbr.rel (%p220) target = $region40
        $region39: #{tpu_custom_call.1} parent=31 // pred_region
          %224 = dma.done %s216, 128
        $region40: #{tpu_custom_call.1} parent=31 // pred_fallthru
          _
        %s225 = sand.u32 %s23, 1
        %s226 = scalar_lea.sflag [#allocation6], %s225
        %s227 = sand.u32 %s83, 1
        %s228 = smul.addr %s227, 8
        %s229 = scalar_lea.vmem [#allocation7], %s228
        // Predicated region
        $region41: #{tpu_custom_call.1} parent=31 // pred_check
          %p230 = pneg %p96
        $region42: #{tpu_custom_call.1} parent=31 // pred_check_branch
          %232 = sbr.rel (%p230) target = $region44
        $region43: #{tpu_custom_call.1} parent=31 // pred_region
          %234 = dma.done %s226, 128
        $region44: #{tpu_custom_call.1} parent=31 // pred_fallthru
          _
        %s235 = sand.u32 %s31, 1
        %s236 = scalar_lea.sflag [#allocation3], %s235
        %s237 = sand.u32 %s31, 1
        %s238 = smul.addr %s237, 8
        %s239 = scalar_lea.vmem [#allocation2], %s238
        %p240 = pneg %p44
        %p241 = pneg %p41
        %s242 = sand.u32 %s23, 1
        %s243 = scalar_lea.sflag [#allocation6], %s242
        %s244 = sand.u32 %s57, 1
        %s245 = smul.addr %s244, 8
        %s246 = scalar_lea.vmem [#allocation5], %s245
        %p247 = pneg %p70
        %p248 = pneg %p67
        %s249 = sand.u32 %s23, 1
        %s250 = scalar_lea.sflag [#allocation6], %s249
        %s251 = sand.u32 %s83, 1
        %s252 = smul.addr %s251, 8
        %s253 = scalar_lea.vmem [#allocation7], %s252
        %p254 = pneg %p96
        %p255 = pneg %p93
        %p256 = pneg %p122
        %p257 = pneg %p119
        %s258 = sand.u32 %s109, 1
        %s259 = scalar_lea.sflag [#allocation4], %s258
        %s260 = sand.u32 %s109, 1
        %s261 = smul.addr %s260, 8
        %s262 = scalar_lea.vmem [#allocation8], %s261
        %v263 = vld [vmem:[%s209] sm:$0xff]
        %v264 = vld [vmem:[%s219] sm:$0xff]
        %v265 = vadd.f32 %v263, %v264
        %v266 = vld [vmem:[%s229] sm:$0xff]
        %v267 = vadd.f32 %v265, %v266
        %268 = vst [vmem:[%s262] sm:$0xff] %v267
        %s269 = sand.u32 %s109, 1
        %s270 = scalar_lea.sflag [#allocation4], %s269
        %s271 = sand.u32 %s109, 1
        %s272 = smul.addr %s271, 8
        %s273 = scalar_lea.vmem [#allocation8], %s272
        // Predicated region
        $region45: #{tpu_custom_call.1} parent=31 // pred_check
          %p274 = pneg %p119
        $region46: #{tpu_custom_call.1} parent=31 // pred_check_branch
          %276 = sbr.rel (%p274) target = $region48
        $region47: #{tpu_custom_call.1} parent=31 // pred_region
          %278 = vsyncadd %s270, 0
          %s279 = smul.addr %s23, 8
          %s280 = scalar_lea.hbm %s3, %s279
          %s282 = sshll.u32 %s273, 4
          %s283 = int_to_ptr.vmem [resolvable:$true] %s282
          %s284 = sshll.u32 %s280, 4
          %s285 = int_to_ptr.hbm [resolvable:$true] %s284
          %287 = dma.vmem_to_hbm [thread:$0]  %s283, 128, %s285, %s270
        $region48: #{tpu_custom_call.1} parent=31 // pred_fallthru
          _
      $region32: #{tpu_custom_call.1} parent=5 // pred_fallthru
        _
      %p288 = scmp.le.s32.totalorder 2, %s18
      // Predicated region
      $region49: #{tpu_custom_call.1} parent=5 // pred_check
        %p289 = pneg %p288
      $region50: #{tpu_custom_call.1} parent=5 // pred_check_branch
        %291 = sbr.rel (%p289) target = $region52
      $region51: #{tpu_custom_call.1} parent=5 // pred_region
        %s292 = ssub.s32 %s18, 2
        // Predicated region
        $region53: #{tpu_custom_call.1} parent=51 // pred_check
          %p293 = pneg %p125
        $region54: #{tpu_custom_call.1} parent=51 // pred_check_branch
          %295 = sbr.rel (%p293) target = $region56
        $region55: #{tpu_custom_call.1} parent=51 // pred_region
          %s296 = sand.u32 %s110, 1
          %s297 = scalar_lea.sflag [#allocation4], %s296
          %s298 = sand.u32 %s110, 1
          %s299 = smul.addr %s298, 8
          %s300 = scalar_lea.vmem [#allocation8], %s299
          %302 = dma.done %s297, 128
        $region56: #{tpu_custom_call.1} parent=51 // pred_fallthru
          _
      $region52: #{tpu_custom_call.1} parent=5 // pred_fallthru
        _
    $region6: #{tpu_custom_call.1} parent=1 // loop_footer
      %s22 = sadd.s32 1, %s18
    $region7: #{tpu_custom_call.1} parent=1 // loop_footer_branch
      %17 = sbr.rel target = $region3
    $region8: #{tpu_custom_call.1} parent=1 // loop_exit
      _
    %303 = vsyncpa [#allocation3], 1
    %s304 = scalar_lea.sflag [#allocation3], 1
    %305 = vsyncpa %s304, 1
    %306 = vsyncpa [#allocation6], 1
    %s307 = scalar_lea.sflag [#allocation6], 1
    %308 = vsyncpa %s307, 1
    %309 = vsyncpa [#allocation4], 1
    %s310 = scalar_lea.sflag [#allocation4], 1
    %311 = vsyncpa %s310, 1

</llo_original>
